<compile_context>
chip_gen: v7x
topology: tpu7x:2x2x1
jax: 0.10.0
libtpu: 0.0.40
codegen_flags: <defaults>
</compile_context>

<pallas_src>
import functools

import numpy as np
import jax
import jax.numpy as jnp
from jax import lax
from jax.experimental import pallas as pl
from jax.experimental.pallas import tpu as pltpu

_BRANCHES = ((1, 0), (2, 1), (3, 2))   # (dilation, padding) for conv1/2/3


def _quantize_int8(w):
    """Emulate brevitas INT8 weight quant, const power-of-two scale = 1.0."""
    return jnp.round(jnp.clip(w, -1.0, 1.0) * 127.0) / 127.0


def _round_up(x, m):
    return ((x + m - 1) // m) * m


@functools.lru_cache(maxsize=None)
def _pltpu_roll_matches_numpy():
    """Tiny probe: determine pltpu.roll's rotation convention once.

    jnp.roll convention means out[i] = x[(i - shift) mod n]; guarding against a
    convention difference keeps the tap math correct across jax versions.
    """
    def probe(x_ref, o_ref):
        o_ref[...] = pltpu.roll(x_ref[...], 1, 1)

    x = jnp.broadcast_to(jnp.arange(128, dtype=jnp.float32), (8, 128))
    y = pl.pallas_call(
        probe, out_shape=jax.ShapeDtypeStruct((8, 128), jnp.float32))(x)
    return bool(np.asarray(y)[0, 0] == 127.0)


def acff_kernel(x_ref, wdw_ref, wex_ref, scale_ref, bias_ref, out_ref,
                *, Wp, roll_like_numpy):
    # x_ref    : (R, Sp)       R = (batch-in-group x channel) rows,
    #                          Sp = lane-padded Hp*Wp (multiple of 128)
    # wdw_ref  : (R, 27)       depthwise weights, column = branch*9 + ky*3 + kx
    # wex_ref  : (G*Cout, 3R)  1x1 weights, block-diagonal over the G batch rows
    # scale_ref: (G*Cout, 1)   folded BN scale (gamma / sqrt(var + eps))
    # bias_ref : (G*Cout, 1)   folded BN bias  (beta - mean * scale)
    # out_ref  : (G*Cout, Sp)  lane-dense output slab (valid region sliced outside)
    xs = x_ref[...]                                    # whole slab, loaded once
    wdw = wdw_ref[...]
    R, Sp = xs.shape

    branch_slabs = []
    for b, (d, p) in enumerate(_BRANCHES):
        off = 2 - p                    # branch start offset in the pad-2 frame
        br = jnp.zeros((R, Sp), jnp.float32)
        for ky in range(3):
            for kx in range(3):
                s = (off + ky * d) * Wp + (off + kx * d)
                if s == 0:
                    tap = xs
                else:
                    # out[p] needs x[p + s]: rotate the register-resident slab
                    # (XLU).  Wrapped lanes only reach positions >= Sp - s,
                    # which are always past the last valid output position.
                    amount = (Sp - s) if roll_like_numpy else s
                    tap = pltpu.roll(xs, amount, 1)
                k = b * 9 + ky * 3 + kx
                br = br + wdw[:, k:k + 1] * tap        # full-vreg VPU FMA
        branch_slabs.append(br)

    # Fused 1x1 conv on the MXU: a single (G*Cout, 3R) x (3R, Sp) matmul with a
    # block-diagonal weight (one diagonal block per batch row in the group),
    # f32 accumulation.  The concat is tile-aligned (each slab is R=8 rows).
    cat = jnp.concatenate(branch_slabs, axis=0)                     # (3R, Sp)
    acc = jnp.dot(wex_ref[...], cat, preferred_element_type=jnp.float32)

    # LeakyReLU(0.01), then inference BatchNorm (folded scale / bias).
    y = jnp.where(acc > 0, acc, 0.01 * acc)
    y = y * scale_ref[...] + bias_ref[...]

    # TODO(synk): Dropout(0.2) / training-mode BatchNorm statistics are not
    # implemented; eval-mode semantics (identity dropout, running stats) used.
    out_ref[...] = y.astype(out_ref.dtype)


def acff_forward(x_nchw, w_dw, w_fused, bn_scale, bn_bias):
    """x_nchw: (N, C, H, W). Returns (N, Cout, H-2, W-2) in PyTorch NCHW layout."""
    N, C, H, W = x_nchw.shape
    Cout = w_fused.shape[1]
    Hout, Wout = H - 2, W - 2
    Hp, Wp = H + 4, W + 4
    S = Hp * Wp
    Sp = _round_up(S, 128)

    # Batch-group size G: pack >= 8 sublane rows per block when possible so the
    # depthwise rolls / FMAs run on full vregs; groups form a "parallel" grid
    # axis (shards across TensorCores on v7x when N > G, trivial loop otherwise).
    G = N
    if C < 8 and 8 % C == 0 and (8 // C) <= N and N % (8 // C) == 0:
        G = 8 // C
    if N // G > 1 and ((G * C) % 8 != 0 or (G * Cout) % 8 != 0):
        G = N                                    # fall back to full-array blocks
    ngroups = N // G
    R = G * C

    # Input: pad by 2 (max branch padding), fold (n, c) onto sublanes and the
    # padded spatial extent onto lanes, lane-pad to a multiple of 128.
    xpad = jnp.pad(x_nchw, ((0, 0), (0, 0), (2, 2), (2, 2)))        # (N,C,Hp,Wp)
    xflat = jnp.pad(xpad.reshape(N * C, S), ((0, 0), (0, Sp - S)))  # (N*C, Sp)

    # Depthwise weights (C, 27), tiled across the G batch rows of a block.
    wdw_c = jnp.transpose(w_dw, (3, 0, 1, 2)).reshape(C, 27)
    wdw_k = jnp.tile(wdw_c, (G, 1))                                 # (R, 27)

    # Fused 1x1 weights, expanded block-diagonally over the G batch rows so the
    # fuse is one 2D MXU matmul per block:
    #   wex[m*Cout + o, b*R + m*C + c] = w_fused[b*C + c, o]
    wf_obc = jnp.transpose(w_fused, (1, 0)).reshape(Cout, 3, C)
    wex = jnp.einsum("mn,obc->mobnc", jnp.eye(G, dtype=w_fused.dtype), wf_obc)
    wex = wex.reshape(G * Cout, 3 * R)

    # Folded BN scale / bias, tiled across the G batch rows.
    scale_k = jnp.tile(bn_scale.reshape(Cout, 1), (G, 1))           # (G*Cout, 1)
    bias_k = jnp.tile(bn_bias.reshape(Cout, 1), (G, 1))

    kernel = functools.partial(acff_kernel, Wp=Wp,
                               roll_like_numpy=_pltpu_roll_matches_numpy())

    out_flat = pl.pallas_call(
        kernel,
        out_shape=jax.ShapeDtypeStruct((N * Cout, Sp), jnp.float32),
        grid=(ngroups,),
        in_specs=[
            pl.BlockSpec((R, Sp), lambda g: (g, 0)),
            pl.BlockSpec((R, 27), lambda g: (0, 0)),
            pl.BlockSpec((G * Cout, 3 * R), lambda g: (0, 0)),
            pl.BlockSpec((G * Cout, 1), lambda g: (0, 0)),
            pl.BlockSpec((G * Cout, 1), lambda g: (0, 0)),
        ],
        out_specs=pl.BlockSpec((G * Cout, Sp), lambda g: (g, 0)),
        compiler_params=pltpu.CompilerParams(
            dimension_semantics=("parallel",),
            vmem_limit_bytes=32 * 1024 * 1024),
    )(xflat, wdw_k, wex, scale_k, bias_k)

    # Drop lane padding / garbage positions.  Output rows are already ordered
    # (n, cout), so only a slice + reshape is needed to return NCHW.
    out = out_flat[:, :S].reshape(N, Cout, Hp, Wp)[:, :, :Hout, :Wout]
    return out


def acff_reference(x_nchw, w_dw, w_fused, bn_scale, bn_bias):
    """Pure-JAX reference (lax.conv) for correctness checking. Returns NCHW."""
    x_nhwc = jnp.transpose(x_nchw, (0, 2, 3, 1))
    C = x_nhwc.shape[-1]
    dn = lax.conv_dimension_numbers(x_nhwc.shape, (3, 3, 1, C),
                                    ("NHWC", "HWIO", "NHWC"))
    outs = []
    for di, (d, p) in enumerate(_BRANCHES):
        rhs = w_dw[di][:, :, None, :]                               # (3,3,1,C)
        o = lax.conv_general_dilated(
            x_nhwc, rhs, window_strides=(1, 1), padding=[(p, p), (p, p)],
            rhs_dilation=(d, d), dimension_numbers=dn, feature_group_count=C)
        outs.append(o)
    cat = jnp.concatenate(outs, axis=-1)                            # (N,Ho,Wo,3C)
    y = jnp.einsum("nhwc,cd->nhwd", cat, w_fused)
    y = jnp.where(y > 0, y, 0.01 * y)
    y = y * bn_scale + bn_bias
    return jnp.transpose(y, (0, 3, 1, 2))                           # NCHW


if __name__ == "__main__":
    key = jax.random.PRNGKey(0)
    k1, k2, k3 = jax.random.split(key, 3)

    # Small shapes consistent with the module.
    N, C, H, W = 2, 4, 16, 16        # in_channels = 4
    Cout = 8                          # out_channels = 8

    x_nchw = jax.random.normal(k1, (N, C, H, W), jnp.float32)

    # Depthwise weights for the 3 branches: [branch, ky, kx, channel]
    # (equivalent to three torch tensors of shape (C, 1, 3, 3)).
    w_dw = _quantize_int8(jax.random.normal(k2, (3, 3, 3, C), jnp.float32) * 0.3)

    # Fused 1x1 conv weight: torch shape (Cout, 3C, 1, 1) -> (3C, Cout).
    w_fused = _quantize_int8(
        jax.random.normal(k3, (3 * C, Cout), jnp.float32) * 0.3)

    # BatchNorm2d inference params (default init): gamma=1, beta=0, mean=0, var=1.
    eps = 1e-5
    gamma = jnp.ones((Cout,), jnp.float32)
    beta = jnp.zeros((Cout,), jnp.float32)
    running_mean = jnp.zeros((Cout,), jnp.float32)
    running_var = jnp.ones((Cout,), jnp.float32)
    bn_scale = gamma / jnp.sqrt(running_var + eps)
    bn_bias = beta - running_mean * bn_scale

    out = acff_forward(x_nchw, w_dw, w_fused, bn_scale, bn_bias)
    out = jax.block_until_ready(out)

    ref = acff_reference(x_nchw, w_dw, w_fused, bn_scale, bn_bias)
    # Tolerance leaves headroom for the MXU's f32 pass decomposition in the
    # fused 1x1 matmul (contraction depth 3C); still catches any logic error.
    np.testing.assert_allclose(np.asarray(out), np.asarray(ref),
                               rtol=2e-3, atol=2e-3)
    assert out.shape == (N, Cout, H - 2, W - 2)
    print("KERNEL_OK")
</pallas_src>

<mosaic_0001>
module attributes {stable_mosaic.version = 11 : i64} {
  func.func @probe(%arg0: memref<8x128xf32, #tpu.memory_space<vmem>>, %arg1: memref<8x128xf32, #tpu.memory_space<vmem>>) attributes {dimension_semantics = [], scalar_prefetch = 0 : i64, scratch_operands = 0 : i64, tpu.core_type = #tpu.core_type<tc>} {
    %c0 = arith.constant 0 : index
    %c0_0 = arith.constant 0 : index
    %0 = vector.load %arg0[%c0, %c0_0] : memref<8x128xf32, #tpu.memory_space<vmem>>, vector<8x128xf32>
    %c1_i32 = arith.constant 1 : i32
    %1 = tpu.dynamic_rotate %0 by %c1_i32 dim 1 : vector<8x128xf32>, i32 -> vector<8x128xf32>
    %c0_1 = arith.constant 0 : index
    %c0_2 = arith.constant 0 : index
    %2 = vector.load %arg1[%c0_1, %c0_2] : memref<8x128xf32, #tpu.memory_space<vmem>>, vector<8x128xf32>
    tpu.vector_store %arg1[%c0_1, %c0_2], %1 {strides = array<i32>} : memref<8x128xf32, #tpu.memory_space<vmem>>, vector<8x128xf32>,
    return
  }
}

</mosaic_0001>

<llo_original>
// kernel: tpu_custom_call.1
$region0: #{tpu_custom_call.1}
  #allocation0 [shape = 'u32[]', space=smem, size = 0x4, offset = 0x4, fixed_abs, tag = 'smem constant byte address 0x4 - core index']
  #allocation1 [shape = 'u32[144,128]{1,0:T(1,128)}', space=vmem, size = 0x12000, scoped, tag = 'internal scratch']
  %s0 = inlined_call_operand.hbm [shape: f32[8,128], index: 0, kind: input, shape index: {}]
  %s1 = inlined_call_operand.hbm [shape: f32[8,128], index: 1, kind: output, shape index: {}]
  %s2 = sld [smem:[#allocation0]]
  $region18: #{tpu_custom_call.1} parent=0
    _
  %s4 = ssub.s32 1, %s2
  %s5 = scalar_select 0, %s4, %s2
  $region1: #{tpu_custom_call.1} parent=0
    #allocation2 [shape = 'u8[4096]{0}', space=vmem, size = 0x1000, scoped, tag = 'input window, operand 0, single buffered']
    #allocation3 [shape = 's32[1]{0}', space=sflag, size = 0x4, scoped, tag = 'scoped memory for tpu_custom_call.1']
    #allocation4 [shape = 's32[1]{0}', space=sflag, size = 0x4, scoped, tag = 'scoped memory for tpu_custom_call.1']
    #allocation5 [shape = 'u8[4096]{0}', space=vmem, size = 0x1000, scoped, tag = 'output window, operand 0, single buffered']
    %6 = vsyncpa [#allocation3], 0
    %7 = vsyncpa [#allocation4], 0
    // Predicated region
    $region2: #{tpu_custom_call.1} parent=1 // pred_check
      _
    $region3: #{tpu_custom_call.1} parent=1 // pred_check_branch
      %9 = sbr.rel (0) target = $region5
    $region4: #{tpu_custom_call.1} parent=1 // pred_region
      %s11 = ssub.s32 128, 128
      %12 = vsyncadd [#allocation3], %s11
      %s14 = sshll.u32 [#allocation2], 4
      %s15 = int_to_ptr.vmem [resolvable:$true] %s14
      %17 = dma.hbm_to_vmem [thread:$0]  %s0, 128, %s15, [#allocation3]
    $region5: #{tpu_custom_call.1} parent=1 // pred_fallthru
      _
    // Predicated region
    $region6: #{tpu_custom_call.1} parent=1 // pred_check
      _
    $region7: #{tpu_custom_call.1} parent=1 // pred_check_branch
      %19 = sbr.rel (0) target = $region9
    $region8: #{tpu_custom_call.1} parent=1 // pred_region
      %20 = dma.done [#allocation3], 128
    $region9: #{tpu_custom_call.1} parent=1 // pred_fallthru
      _
    %v21 = vld [vmem:[#allocation2] sm:$0xff]
    %22 = vrot.lane.b32.xlu0 %v21, 1
    %v23 = vpop.permute.xlu0 %22
    %24 = vst [vmem:[#allocation5] sm:$0xff] %v23
    // Predicated region
    $region10: #{tpu_custom_call.1} parent=1 // pred_check
      _
    $region11: #{tpu_custom_call.1} parent=1 // pred_check_branch
      %26 = sbr.rel (0) target = $region13
    $region12: #{tpu_custom_call.1} parent=1 // pred_region
      %s28 = ssub.s32 128, 128
      %29 = vsyncadd [#allocation4], %s28
      %s31 = sshll.u32 [#allocation5], 4
      %s32 = int_to_ptr.vmem [resolvable:$true] %s31
      %34 = dma.vmem_to_hbm [thread:$0]  %s32, 128, %s1, [#allocation4]
    $region13: #{tpu_custom_call.1} parent=1 // pred_fallthru
      _
    // Predicated region
    $region14: #{tpu_custom_call.1} parent=1 // pred_check
      _
    $region15: #{tpu_custom_call.1} parent=1 // pred_check_branch
      %36 = sbr.rel (0) target = $region17
    $region16: #{tpu_custom_call.1} parent=1 // pred_region
      %37 = dma.done [#allocation4], 128
    $region17: #{tpu_custom_call.1} parent=1 // pred_fallthru
      _
    %38 = vsyncpa [#allocation3], 1
    %39 = vsyncpa [#allocation4], 1

</llo_original>
